<compile_context>
chip_gen: v7x
topology: tpu7x:2x2x1
jax: 0.10.0
libtpu: 0.0.40
codegen_flags: <defaults>
</compile_context>

<pallas_src>
import numpy as np
import jax
import jax.numpy as jnp
from jax.experimental import pallas as pl
from jax.experimental.pallas import tpu as pltpu

HIDDEN = 512        # fixed by the module definition
LANE = 128          # TPU vreg lane width
SUBLANE_F32 = 8     # f32 sublane granule


def _round_up(x, m):
    return (x + m - 1) // m * m


def _encoder_kernel(x_ref, w1_ref, b1_ref, w2_ref, b2_ref, o_ref):
    # x arrives as f32 straight from HBM; cast to bf16 on the VPU right before
    # the MXU dot (no wrapper-side cast/rematerialization).
    x_bf16 = x_ref[...].astype(jnp.bfloat16)
    h = jnp.dot(x_bf16, w1_ref[...], preferred_element_type=jnp.float32)
    # Bias add + ReLU stay in f32 on the VPU (v5e has no bf16 VALU path).
    h = jnp.maximum(h + b1_ref[...], 0.0)
    out = jnp.dot(h.astype(jnp.bfloat16), w2_ref[...],
                  preferred_element_type=jnp.float32)
    o_ref[...] = (out + b2_ref[...]).astype(o_ref.dtype)


def prepare_encoder_params(w1, b1, w2, b2):
    """Pad/cast the weights ONCE (hoisted out of the per-call path)."""
    d_in, d_out = w1.shape[0], w2.shape[1]
    d_in_p = _round_up(d_in, LANE)
    d_out_p = _round_up(d_out, LANE)
    w1_p = jnp.zeros((d_in_p, HIDDEN), jnp.bfloat16).at[:d_in, :].set(
        w1.astype(jnp.bfloat16))
    b1_p = b1.astype(jnp.float32).reshape(1, HIDDEN)
    w2_p = jnp.zeros((HIDDEN, d_out_p), jnp.bfloat16).at[:, :d_out].set(
        w2.astype(jnp.bfloat16))
    b2_p = jnp.zeros((1, d_out_p), jnp.float32).at[0, :d_out].set(
        b2.astype(jnp.float32))
    return {"w1": w1_p, "b1": b1_p, "w2": w2_p, "b2": b2_p,
            "d_in": d_in, "d_out": d_out}


def _select_tile_m(B, d_in_p, d_out_p, tile_m_cap):
    """Pick a sublane-aligned batch tile that (a) amortizes per-step overhead,
    (b) yields >= 2 grid steps when possible (v7x dual-TC), (c) fits VMEM."""
    if B <= 2 * SUBLANE_F32:
        tm = _round_up(max(B, 1), SUBLANE_F32)           # single tiny tile
    elif B <= tile_m_cap:
        tm = _round_up(pl.cdiv(B, 2), SUBLANE_F32)       # split across 2 TCs
    else:
        tm = tile_m_cap

    def vmem_bytes(tm_):
        # Resident weights (single-buffered) + double-buffered x/out streams
        # + f32 intermediates inside the body.
        weights = (d_in_p * HIDDEN * 2 + HIDDEN * d_out_p * 2
                   + (HIDDEN + d_out_p) * 4)
        streams = 2 * tm_ * (d_in_p * 4 + d_out_p * 4)
        interm = tm_ * HIDDEN * 8 + tm_ * max(d_in_p, d_out_p) * 4
        return weights + streams + interm

    budget = 48 << 20   # leave headroom on v7x's 64 MiB physical VMEM
    while tm > SUBLANE_F32 and vmem_bytes(tm) > budget:
        tm = max(SUBLANE_F32, _round_up(tm // 2, SUBLANE_F32))
    return tm, vmem_bytes(tm)


def encoder_forward(x, params, *, tile_m_cap=512, out_dtype=jnp.float32):
    """x: (B, d_in) f32.  Returns (B, d_out) == ReLU(x @ w1 + b1) @ w2 + b2."""
    B, d_in = x.shape
    assert d_in == params["d_in"], "input_dim mismatch with prepared params"
    w1_p, b1_p = params["w1"], params["b1"]
    w2_p, b2_p = params["w2"], params["b2"]
    d_out = params["d_out"]
    d_in_p, d_out_p = w1_p.shape[0], w2_p.shape[1]

    tm, vmem_est = _select_tile_m(B, d_in_p, d_out_p, tile_m_cap)
    b_p = _round_up(B, tm)

    # Pad x only when the shapes actually require it (stays f32; the bf16 cast
    # happens in-kernel).
    if b_p != B or d_in_p != d_in:
        x_in = jnp.zeros((b_p, d_in_p), jnp.float32).at[:B, :d_in].set(
            x.astype(jnp.float32))
    else:
        x_in = x.astype(jnp.float32)

    grid = (b_p // tm,)

    flops = 2 * b_p * (d_in_p * HIDDEN + HIDDEN * d_out_p)
    out_itemsize = np.dtype(out_dtype).itemsize
    bytes_accessed = (x_in.size * 4 + w1_p.size * 2 + w2_p.size * 2
                      + b1_p.size * 4 + b2_p.size * 4
                      + b_p * d_out_p * out_itemsize)

    # Explicit VMEM limit derived from the actual padded shapes (+ headroom),
    # instead of the scoped default (16 MiB v5e / 32 MiB v6e, v7x).
    vmem_limit = int(min(max(vmem_est + (8 << 20), 32 << 20), 100 << 20))

    def run(single_buffer_weights):
        resident = ({"pipeline_mode": pl.Buffered(1)}
                    if single_buffer_weights else {})
        in_specs = [
            pl.BlockSpec((tm, d_in_p), lambda i: (i, 0)),                  # x tile
            pl.BlockSpec((d_in_p, HIDDEN), lambda i: (0, 0), **resident),  # W1
            pl.BlockSpec((1, HIDDEN), lambda i: (0, 0), **resident),       # b1
            pl.BlockSpec((HIDDEN, d_out_p), lambda i: (0, 0), **resident), # W2
            pl.BlockSpec((1, d_out_p), lambda i: (0, 0), **resident),      # b2
        ]
        return pl.pallas_call(
            _encoder_kernel,
            out_shape=jax.ShapeDtypeStruct((b_p, d_out_p), out_dtype),
            grid=grid,
            in_specs=in_specs,
            out_specs=pl.BlockSpec((tm, d_out_p), lambda i: (i, 0)),
            compiler_params=pltpu.CompilerParams(
                dimension_semantics=("parallel",),
                vmem_limit_bytes=vmem_limit),
            cost_estimate=pl.CostEstimate(
                flops=flops, transcendentals=0,
                bytes_accessed=bytes_accessed),
        )(x_in, w1_p, b1_p, w2_p, b2_p)

    try:
        out_p = run(single_buffer_weights=True)
    except Exception:
        # Fallback for jax versions that reject pipeline_mode=pl.Buffered(1):
        # default double-buffered resident weights (costs VMEM only).
        out_p = run(single_buffer_weights=False)

    if b_p != B or d_out_p != d_out:
        return out_p[:B, :d_out]
    return out_p


def init_encoder_params(key, input_dim, output_dim, dtype=jnp.float32):
    """Deterministic init mimicking PyTorch nn.Linear defaults."""
    k1, k2, k3, k4 = jax.random.split(key, 4)
    bound1 = 1.0 / np.sqrt(input_dim)
    bound2 = 1.0 / np.sqrt(HIDDEN)
    w1 = jax.random.uniform(k1, (input_dim, HIDDEN), dtype, -bound1, bound1)
    b1 = jax.random.uniform(k2, (HIDDEN,), dtype, -bound1, bound1)
    w2 = jax.random.uniform(k3, (HIDDEN, output_dim), dtype, -bound2, bound2)
    b2 = jax.random.uniform(k4, (output_dim,), dtype, -bound2, bound2)
    return w1, b1, w2, b2


def _check(x, w1, b1, w2, b2, out):
    # f32 reference (PyTorch semantics): bf16-MXU tolerance.
    ref_f32 = jnp.maximum(x @ w1 + b1, 0.0) @ w2 + b2
    np.testing.assert_allclose(np.asarray(out), np.asarray(ref_f32),
                               rtol=5e-2, atol=5e-2)
    # bf16-matched reference (same mixed-precision recipe): tight tolerance.
    h_ref = jnp.maximum(
        jnp.dot(x.astype(jnp.bfloat16), w1.astype(jnp.bfloat16),
                preferred_element_type=jnp.float32) + b1, 0.0)
    ref_bf16 = jnp.dot(h_ref.astype(jnp.bfloat16), w2.astype(jnp.bfloat16),
                       preferred_element_type=jnp.float32) + b2
    np.testing.assert_allclose(np.asarray(out), np.asarray(ref_bf16),
                               rtol=1e-3, atol=1e-3)


if __name__ == "__main__":
    key = jax.random.PRNGKey(0)
    input_dim, output_dim = 32, 16

    kx, kx2, kp = jax.random.split(key, 3)
    w1, b1, w2, b2 = init_encoder_params(kp, input_dim, output_dim)
    params = prepare_encoder_params(w1, b1, w2, b2)   # pad/cast weights once

    # Small batch: single-tile grid.
    x = jax.random.normal(kx, (8, input_dim), jnp.float32)
    out = jax.block_until_ready(encoder_forward(x, params))
    assert out.shape == (8, output_dim)
    _check(x, w1, b1, w2, b2, out)

    # Slightly larger, non-aligned batch: exercises multi-step grid (>=2 tiles
    # for dual-TC sharding) plus batch padding / output slicing.
    x2 = jax.random.normal(kx2, (40, input_dim), jnp.float32)
    out2 = jax.block_until_ready(encoder_forward(x2, params))
    assert out2.shape == (40, output_dim)
    _check(x2, w1, b1, w2, b2, out2)

    print("KERNEL_OK")
</pallas_src>

<mosaic_0001>
module attributes {stable_mosaic.version = 11 : i64} {
  func.func @_encoder_kernel(%arg0: i32, %arg1: memref<8x128xf32, #tpu.memory_space<vmem>>, %arg2: memref<128x512xbf16, #tpu.memory_space<vmem>>, %arg3: memref<1x512xf32, #tpu.memory_space<vmem>>, %arg4: memref<512x128xbf16, #tpu.memory_space<vmem>>, %arg5: memref<1x128xf32, #tpu.memory_space<vmem>>, %arg6: memref<8x128xf32, #tpu.memory_space<vmem>>) attributes {dimension_semantics = [#tpu.dimension_semantics<parallel>], iteration_bounds = array<i64: 1>, scalar_prefetch = 0 : i64, scratch_operands = 0 : i64, tpu.core_type = #tpu.core_type<tc>, window_params = [{transform_indices = @transform_0, window_bounds = array<i64: 8, 128>}, {pipeline_mode = #tpu.pipeline_mode<synchronous>, transform_indices = @transform_1, window_bounds = array<i64: 128, 512>}, {pipeline_mode = #tpu.pipeline_mode<synchronous>, transform_indices = @transform_2, window_bounds = array<i64: 1, 512>}, {pipeline_mode = #tpu.pipeline_mode<synchronous>, transform_indices = @transform_3, window_bounds = array<i64: 512, 128>}, {pipeline_mode = #tpu.pipeline_mode<synchronous>, transform_indices = @transform_4, window_bounds = array<i64: 1, 128>}, {transform_indices = @transform_5, window_bounds = array<i64: 8, 128>}]} {
    %c0 = arith.constant 0 : index
    %c0_0 = arith.constant 0 : index
    %0 = vector.load %arg1[%c0, %c0_0] : memref<8x128xf32, #tpu.memory_space<vmem>>, vector<8x128xf32>
    %1 = arith.truncf %0 : vector<8x128xf32> to vector<8x128xbf16>
    %c0_1 = arith.constant 0 : index
    %c0_2 = arith.constant 0 : index
    %2 = vector.load %arg2[%c0_1, %c0_2] : memref<128x512xbf16, #tpu.memory_space<vmem>>, vector<128x512xbf16>
    %cst = arith.constant dense<0.000000e+00> : vector<8x512xf32>
    %3 = tpu.matmul %1, %2, %cst {dimension_numbers = #tpu.dot_dimension_numbers<[1], [0], [0], [1], [0, 0, 1, 1], [], []>} : vector<8x128xbf16>, vector<128x512xbf16>, vector<8x512xf32> -> vector<8x512xf32>
    %c0_3 = arith.constant 0 : index
    %c0_4 = arith.constant 0 : index
    %4 = vector.load %arg3[%c0_3, %c0_4] : memref<1x512xf32, #tpu.memory_space<vmem>>, vector<1x512xf32>
    %5 = vector.broadcast %4 : vector<1x512xf32> to vector<8x512xf32>
    %6 = arith.addf %3, %5 : vector<8x512xf32>
    %cst_5 = arith.constant 0.000000e+00 : f32
    %7 = vector.broadcast %cst_5 : f32 to vector<8x512xf32>
    %8 = arith.maximumf %6, %7 : vector<8x512xf32>
    %9 = arith.truncf %8 : vector<8x512xf32> to vector<8x512xbf16>
    %c0_6 = arith.constant 0 : index
    %c0_7 = arith.constant 0 : index
    %10 = vector.load %arg4[%c0_6, %c0_7] : memref<512x128xbf16, #tpu.memory_space<vmem>>, vector<512x128xbf16>
    %cst_8 = arith.constant dense<0.000000e+00> : vector<8x128xf32>
    %11 = tpu.matmul %9, %10, %cst_8 {dimension_numbers = #tpu.dot_dimension_numbers<[1], [0], [0], [1], [0, 0, 1, 1], [], []>} : vector<8x512xbf16>, vector<512x128xbf16>, vector<8x128xf32> -> vector<8x128xf32>
    %c0_9 = arith.constant 0 : index
    %c0_10 = arith.constant 0 : index
    %12 = vector.load %arg5[%c0_9, %c0_10] : memref<1x128xf32, #tpu.memory_space<vmem>>, vector<1x128xf32>
    %13 = vector.broadcast %12 : vector<1x128xf32> to vector<8x128xf32>
    %14 = arith.addf %11, %13 : vector<8x128xf32>
    %c0_11 = arith.constant 0 : index
    %c0_12 = arith.constant 0 : index
    %15 = vector.load %arg6[%c0_11, %c0_12] : memref<8x128xf32, #tpu.memory_space<vmem>>, vector<8x128xf32>
    tpu.vector_store %arg6[%c0_11, %c0_12], %14 {strides = array<i32>} : memref<8x128xf32, #tpu.memory_space<vmem>>, vector<8x128xf32>,
    return
  }
  func.func @transform_0(%arg0: i32) -> (i32, i32) {
    %c0_i32 = arith.constant 0 : i32
    %c0_i32_0 = arith.constant 0 : i32
    return %arg0, %c0_i32 : i32, i32
  }
  func.func @transform_1(%arg0: i32) -> (i32, i32) {
    %c0_i32 = arith.constant 0 : i32
    %c0_i32_0 = arith.constant 0 : i32
    %c0_i32_1 = arith.constant 0 : i32
    return %c0_i32, %c0_i32_0 : i32, i32
  }
  func.func @transform_2(%arg0: i32) -> (i32, i32) {
    %c0_i32 = arith.constant 0 : i32
    %c0_i32_0 = arith.constant 0 : i32
    %c0_i32_1 = arith.constant 0 : i32
    return %c0_i32, %c0_i32_0 : i32, i32
  }
  func.func @transform_3(%arg0: i32) -> (i32, i32) {
    %c0_i32 = arith.constant 0 : i32
    %c0_i32_0 = arith.constant 0 : i32
    %c0_i32_1 = arith.constant 0 : i32
    return %c0_i32, %c0_i32_0 : i32, i32
  }
  func.func @transform_4(%arg0: i32) -> (i32, i32) {
    %c0_i32 = arith.constant 0 : i32
    %c0_i32_0 = arith.constant 0 : i32
    %c0_i32_1 = arith.constant 0 : i32
    return %c0_i32, %c0_i32_0 : i32, i32
  }
  func.func @transform_5(%arg0: i32) -> (i32, i32) {
    %c0_i32 = arith.constant 0 : i32
    %c0_i32_0 = arith.constant 0 : i32
    return %arg0, %c0_i32 : i32, i32
  }
}

module attributes {stable_mosaic.version = 11 : i64} {
  func.func @_encoder_kernel(%arg0: i32, %arg1: memref<8x128xf32, #tpu.memory_space<vmem>>, %arg2: memref<128x512xbf16, #tpu.memory_space<vmem>>, %arg3: memref<1x512xf32, #tpu.memory_space<vmem>>, %arg4: memref<512x128xbf16, #tpu.memory_space<vmem>>, %arg5: memref<1x128xf32, #tpu.memory_space<vmem>>, %arg6: memref<8x128xf32, #tpu.memory_space<vmem>>) attributes {dimension_semantics = [#tpu.dimension_semantics<parallel>], iteration_bounds = array<i64: 1>, scalar_prefetch = 0 : i64, scratch_operands = 0 : i64, tpu.core_type = #tpu.core_type<tc>, window_params = [{transform_indices = @transform_0, window_bounds = array<i64: 8, 128>}, {pipeline_mode = #tpu.pipeline_mode<synchronous>, transform_indices = @transform_1, window_bounds = array<i64: 128, 512>}, {pipeline_mode = #tpu.pipeline_mode<synchronous>, transform_indices = @transform_2, window_bounds = array<i64: 1, 512>}, {pipeline_mode = #tpu.pipeline_mode<synchronous>, transform_indices = @transform_3, window_bounds = array<i64: 512, 128>}, {pipeline_mode = #tpu.pipeline_mode<synchronous>, transform_indices = @transform_4, window_bounds = array<i64: 1, 128>}, {transform_indices = @transform_5, window_bounds = array<i64: 8, 128>}]} {
    %c0 = arith.constant 0 : index
    %c0_0 = arith.constant 0 : index
    %0 = vector.load %arg1[%c0, %c0_0] : memref<8x128xf32, #tpu.memory_space<vmem>>, vector<8x128xf32>
    %1 = arith.truncf %0 : vector<8x128xf32> to vector<8x128xbf16>
    %c0_1 = arith.constant 0 : index
    %c0_2 = arith.constant 0 : index
    %2 = vector.load %arg2[%c0_1, %c0_2] : memref<128x512xbf16, #tpu.memory_space<vmem>>, vector<128x512xbf16>
    %cst = arith.constant dense<0.000000e+00> : vector<8x512xf32>
    %3 = tpu.matmul %1, %2, %cst {dimension_numbers = #tpu.dot_dimension_numbers<[1], [0], [0], [1], [0, 0, 1, 1], [], []>} : vector<8x128xbf16>, vector<128x512xbf16>, vector<8x512xf32> -> vector<8x512xf32>
    %c0_3 = arith.constant 0 : index
    %c0_4 = arith.constant 0 : index
    %4 = vector.load %arg3[%c0_3, %c0_4] : memref<1x512xf32, #tpu.memory_space<vmem>>, vector<1x512xf32>
    %5 = vector.broadcast %4 : vector<1x512xf32> to vector<8x512xf32>
    %6 = arith.addf %3, %5 : vector<8x512xf32>
    %cst_5 = arith.constant 0.000000e+00 : f32
    %7 = vector.broadcast %cst_5 : f32 to vector<8x512xf32>
    %8 = arith.maximumf %6, %7 : vector<8x512xf32>
    %9 = arith.truncf %8 : vector<8x512xf32> to vector<8x512xbf16>
    %c0_6 = arith.constant 0 : index
    %c0_7 = arith.constant 0 : index
    %10 = vector.load %arg4[%c0_6, %c0_7] : memref<512x128xbf16, #tpu.memory_space<vmem>>, vector<512x128xbf16>
    %cst_8 = arith.constant dense<0.000000e+00> : vector<8x128xf32>
    %11 = tpu.matmul %9, %10, %cst_8 {dimension_numbers = #tpu.dot_dimension_numbers<[1], [0], [0], [1], [0, 0, 1, 1], [], []>} : vector<8x512xbf16>, vector<512x128xbf16>, vector<8x128xf32> -> vector<8x128xf32>
    %c0_9 = arith.constant 0 : index
    %c0_10 = arith.constant 0 : index
    %12 = vector.load %arg5[%c0_9, %c0_10] : memref<1x128xf32, #tpu.memory_space<vmem>>, vector<1x128xf32>
    %13 = vector.broadcast %12 : vector<1x128xf32> to vector<8x128xf32>
    %14 = arith.addf %11, %13 : vector<8x128xf32>
    %c0_11 = arith.constant 0 : index
    %c0_12 = arith.constant 0 : index
    %15 = vector.load %arg6[%c0_11, %c0_12] : memref<8x128xf32, #tpu.memory_space<vmem>>, vector<8x128xf32>
    tpu.vector_store %arg6[%c0_11, %c0_12], %14 {strides = array<i32>} : memref<8x128xf32, #tpu.memory_space<vmem>>, vector<8x128xf32>,
    return
  }
  func.func @transform_0(%arg0: i32) -> (i32, i32) {
    %c0_i32 = arith.constant 0 : i32
    %c0_i32_0 = arith.constant 0 : i32
    return %arg0, %c0_i32 : i32, i32
  }
  func.func @transform_1(%arg0: i32) -> (i32, i32) {
    %c0_i32 = arith.constant 0 : i32
    %c0_i32_0 = arith.constant 0 : i32
    %c0_i32_1 = arith.constant 0 : i32
    return %c0_i32, %c0_i32_0 : i32, i32
  }
  func.func @transform_2(%arg0: i32) -> (i32, i32) {
    %c0_i32 = arith.constant 0 : i32
    %c0_i32_0 = arith.constant 0 : i32
    %c0_i32_1 = arith.constant 0 : i32
    return %c0_i32, %c0_i32_0 : i32, i32
  }
  func.func @transform_3(%arg0: i32) -> (i32, i32) {
    %c0_i32 = arith.constant 0 : i32
    %c0_i32_0 = arith.constant 0 : i32
    %c0_i32_1 = arith.constant 0 : i32
    return %c0_i32, %c0_i32_0 : i32, i32
  }
  func.func @transform_4(%arg0: i32) -> (i32, i32) {
    %c0_i32 = arith.constant 0 : i32
    %c0_i32_0 = arith.constant 0 : i32
    %c0_i32_1 = arith.constant 0 : i32
    return %c0_i32, %c0_i32_0 : i32, i32
  }
  func.func @transform_5(%arg0: i32) -> (i32, i32) {
    %c0_i32 = arith.constant 0 : i32
    %c0_i32_0 = arith.constant 0 : i32
    return %arg0, %c0_i32 : i32, i32
  }
}

</mosaic_0001>

<llo_original>
// kernel: tpu_custom_call.1
$region0: #{tpu_custom_call.1}
  #allocation0 [shape = 'u32[]', space=smem, size = 0x4, offset = 0x4, fixed_abs, tag = 'smem constant byte address 0x4 - core index']
  #allocation1 [shape = 'u32[144,128]{1,0:T(1,128)}', space=vmem, size = 0x12000, scoped, tag = 'internal scratch']
  %s0 = inlined_call_operand.hbm [shape: f32[8,128], index: 0, kind: input, shape index: {}]
  %s1 = inlined_call_operand.hbm [shape: bf16[128,512], index: 1, kind: input, shape index: {}]
  %s2 = inlined_call_operand.vmem [shape: f32[1,512], index: 2, kind: input, shape index: {}]
  %s3 = inlined_call_operand.hbm [shape: bf16[512,128], index: 3, kind: input, shape index: {}]
  %s4 = inlined_call_operand.vmem [shape: f32[1,128], index: 4, kind: input, shape index: {}]
  %s5 = inlined_call_operand.hbm [shape: f32[8,128], index: 5, kind: output, shape index: {}]
  %s6 = sld [smem:[#allocation0]]
  $region42: #{tpu_custom_call.1} parent=0
    _
  %s8 = ssub.s32 1, %s6
  %s9 = scalar_select 0, %s8, %s6
  $region1: #{tpu_custom_call.1} parent=0
    #allocation2 [shape = 'u8[4096]{0}', space=vmem, size = 0x1000, scoped, tag = 'input window, operand 0, single buffered']
    #allocation3 [shape = 's32[1]{0}', space=sflag, size = 0x4, scoped, tag = 'scoped memory for tpu_custom_call.1']
    #allocation4 [shape = 's32[1]{0}', space=sflag, size = 0x4, scoped, tag = 'scoped memory for tpu_custom_call.1']
    #allocation5 [shape = 'u8[131072]{0}', space=vmem, size = 0x20000, scoped, tag = 'input window, operand 1, single buffered']
    #allocation6 [shape = 's32[1]{0}', space=sflag, size = 0x4, scoped, tag = 'scoped memory for tpu_custom_call.1']
    #allocation7 [shape = 'u8[131072]{0}', space=vmem, size = 0x20000, scoped, tag = 'input window, operand 3, single buffered']
    #allocation8 [shape = 'u8[4096]{0}', space=vmem, size = 0x1000, scoped, tag = 'output window, operand 0, single buffered']
    %10 = vsyncpa [#allocation3], 0
    %11 = vsyncpa [#allocation6], 0
    %12 = vsyncpa [#allocation4], 0
    // Predicated region
    $region2: #{tpu_custom_call.1} parent=1 // pred_check
      _
    $region3: #{tpu_custom_call.1} parent=1 // pred_check_branch
      %14 = sbr.rel (0) target = $region5
    $region4: #{tpu_custom_call.1} parent=1 // pred_region
      %s16 = ssub.s32 128, 128
      %17 = vsyncadd [#allocation3], %s16
      %s19 = sshll.u32 [#allocation2], 4
      %s20 = int_to_ptr.vmem [resolvable:$true] %s19
      %22 = dma.hbm_to_vmem [thread:$0]  %s0, 128, %s20, [#allocation3]
    $region5: #{tpu_custom_call.1} parent=1 // pred_fallthru
      _
    // Predicated region
    $region6: #{tpu_custom_call.1} parent=1 // pred_check
      _
    $region7: #{tpu_custom_call.1} parent=1 // pred_check_branch
      %24 = sbr.rel (0) target = $region9
    $region8: #{tpu_custom_call.1} parent=1 // pred_region
      %s26 = ssub.s32 4096, 4096
      %27 = vsyncadd [#allocation6], %s26
      %s28 = sshll.u32 [#allocation5], 4
      %s29 = int_to_ptr.vmem [resolvable:$true] %s28
      %34 = dma.hbm_to_vmem [thread:$0]  %s1, 4096, %s29, [#allocation6], 256, 256, 16
    $region9: #{tpu_custom_call.1} parent=1 // pred_fallthru
      _
    // Predicated region
    $region10: #{tpu_custom_call.1} parent=1 // pred_check
      _
    $region11: #{tpu_custom_call.1} parent=1 // pred_check_branch
      %36 = sbr.rel (0) target = $region13
    $region12: #{tpu_custom_call.1} parent=1 // pred_region
      _
    $region13: #{tpu_custom_call.1} parent=1 // pred_fallthru
      _
    // Predicated region
    $region14: #{tpu_custom_call.1} parent=1 // pred_check
      _
    $region15: #{tpu_custom_call.1} parent=1 // pred_check_branch
      %38 = sbr.rel (0) target = $region17
    $region16: #{tpu_custom_call.1} parent=1 // pred_region
      %s40 = ssub.s32 4096, 4096
      %41 = vsyncadd [#allocation6], %s40
      %s42 = sshll.u32 [#allocation7], 4
      %s43 = int_to_ptr.vmem [resolvable:$true] %s42
      %48 = dma.hbm_to_vmem [thread:$0]  %s3, 4096, %s43, [#allocation6], 64, 64, 4
    $region17: #{tpu_custom_call.1} parent=1 // pred_fallthru
      _
    // Predicated region
    $region18: #{tpu_custom_call.1} parent=1 // pred_check
      _
    $region19: #{tpu_custom_call.1} parent=1 // pred_check_branch
      %50 = sbr.rel (0) target = $region21
    $region20: #{tpu_custom_call.1} parent=1 // pred_region
      _
    $region21: #{tpu_custom_call.1} parent=1 // pred_fallthru
      _
    // Predicated region
    $region22: #{tpu_custom_call.1} parent=1 // pred_check
      _
    $region23: #{tpu_custom_call.1} parent=1 // pred_check_branch
      %52 = sbr.rel (0) target = $region25
    $region24: #{tpu_custom_call.1} parent=1 // pred_region
      %53 = dma.done [#allocation3], 128
    $region25: #{tpu_custom_call.1} parent=1 // pred_fallthru
      _
    // Predicated region
    $region26: #{tpu_custom_call.1} parent=1 // pred_check
      _
    $region27: #{tpu_custom_call.1} parent=1 // pred_check_branch
      %55 = sbr.rel (0) target = $region29
    $region28: #{tpu_custom_call.1} parent=1 // pred_region
      %56 = dma.done [#allocation6], 4096
    $region29: #{tpu_custom_call.1} parent=1 // pred_fallthru
      _
    // Predicated region
    $region30: #{tpu_custom_call.1} parent=1 // pred_check
      _
    $region31: #{tpu_custom_call.1} parent=1 // pred_check_branch
      %58 = sbr.rel (0) target = $region33
    $region32: #{tpu_custom_call.1} parent=1 // pred_region
      %59 = dma.done [#allocation6], 4096
    $region33: #{tpu_custom_call.1} parent=1 // pred_fallthru
      _
    %v61 = vld [vmem:[#allocation2] sm:$0xff]
    %v62 = vpack.c.bf16 %v61, %v61
    %v63 = vld [vmem:[#allocation5] sm:$0xff]
    %v64 = vld [vmem:[#allocation5 + $0x8] sm:$0xff]
    %v65 = vld [vmem:[#allocation5 + $0x10] sm:$0xff]
    %v66 = vld [vmem:[#allocation5 + $0x18] sm:$0xff]
    %v67 = vld [vmem:[#allocation5 + $0x20] sm:$0xff]
    %v68 = vld [vmem:[#allocation5 + $0x28] sm:$0xff]
    %v69 = vld [vmem:[#allocation5 + $0x30] sm:$0xff]
    %v70 = vld [vmem:[#allocation5 + $0x38] sm:$0xff]
    %v71 = vld [vmem:[#allocation5 + $0x40] sm:$0xff]
    %v72 = vld [vmem:[#allocation5 + $0x48] sm:$0xff]
    %v73 = vld [vmem:[#allocation5 + $0x50] sm:$0xff]
    %v74 = vld [vmem:[#allocation5 + $0x58] sm:$0xff]
    %v75 = vld [vmem:[#allocation5 + $0x60] sm:$0xff]
    %v76 = vld [vmem:[#allocation5 + $0x68] sm:$0xff]
    %v77 = vld [vmem:[#allocation5 + $0x70] sm:$0xff]
    %v78 = vld [vmem:[#allocation5 + $0x78] sm:$0xff]
    %v79 = vld [vmem:[#allocation5 + $0x80] sm:$0xff]
    %v80 = vld [vmem:[#allocation5 + $0x88] sm:$0xff]
    %v81 = vld [vmem:[#allocation5 + $0x90] sm:$0xff]
    %v82 = vld [vmem:[#allocation5 + $0x98] sm:$0xff]
    %v83 = vld [vmem:[#allocation5 + $0xa0] sm:$0xff]
    %v84 = vld [vmem:[#allocation5 + $0xa8] sm:$0xff]
    %v85 = vld [vmem:[#allocation5 + $0xb0] sm:$0xff]
    %v86 = vld [vmem:[#allocation5 + $0xb8] sm:$0xff]
    %v87 = vld [vmem:[#allocation5 + $0xc0] sm:$0xff]
    %v88 = vld [vmem:[#allocation5 + $0xc8] sm:$0xff]
    %v89 = vld [vmem:[#allocation5 + $0xd0] sm:$0xff]
    %v90 = vld [vmem:[#allocation5 + $0xd8] sm:$0xff]
    %v91 = vld [vmem:[#allocation5 + $0xe0] sm:$0xff]
    %v92 = vld [vmem:[#allocation5 + $0xe8] sm:$0xff]
    %v93 = vld [vmem:[#allocation5 + $0xf0] sm:$0xff]
    %v94 = vld [vmem:[#allocation5 + $0xf8] sm:$0xff]
    %v95 = vld [vmem:[%s2] sm:$0xf]
    %v97 = vlaneseq
    %v98 = vshrl.u32 %v97, 7
    %v99 = vsub.s32 0, %v98
    %v100 = vrot.slane %v95, %v99
    %v101 = vlaneseq
    %v102 = vshrl.u32 %v101, 7
    %v103 = vsub.s32 1, %v102
    %v104 = vrot.slane %v95, %v103
    %v105 = vlaneseq
    %v106 = vshrl.u32 %v105, 7
    %v107 = vsub.s32 2, %v106
    %v108 = vrot.slane %v95, %v107
    %v109 = vlaneseq
    %v110 = vshrl.u32 %v109, 7
    %v111 = vsub.s32 3, %v110
    %v112 = vrot.slane %v95, %v111
    %v149 = vunpack.c.l.b16 %v63
    %v150 = vunpack.c.h.b16 %v63
    %v151 = vunpack.c.l.b16 %v64
    %v152 = vunpack.c.h.b16 %v64
    %v153 = vunpack.c.l.b16 %v65
    %v154 = vunpack.c.h.b16 %v65
    %v155 = vunpack.c.l.b16 %v66
    %v156 = vunpack.c.h.b16 %v66
    %v157 = vunpack.c.l.b16 %v67
    %v158 = vunpack.c.h.b16 %v67
    %v159 = vunpack.c.l.b16 %v68
    %v160 = vunpack.c.h.b16 %v68
    %v161 = vunpack.c.l.b16 %v69
    %v162 = vunpack.c.h.b16 %v69
    %v163 = vunpack.c.l.b16 %v70
    %v164 = vunpack.c.h.b16 %v70
    %v165 = vunpack.c.l.b16 %v71
    %v166 = vunpack.c.h.b16 %v71
    %v167 = vunpack.c.l.b16 %v72
    %v168 = vunpack.c.h.b16 %v72
    %v169 = vunpack.c.l.b16 %v73
    %v170 = vunpack.c.h.b16 %v73
    %v171 = vunpack.c.l.b16 %v74
    %v172 = vunpack.c.h.b16 %v74
    %v173 = vunpack.c.l.b16 %v75
    %v174 = vunpack.c.h.b16 %v75
    %v175 = vunpack.c.l.b16 %v76
    %v176 = vunpack.c.h.b16 %v76
    %v177 = vunpack.c.l.b16 %v77
    %v178 = vunpack.c.h.b16 %v77
    %v179 = vunpack.c.l.b16 %v78
    %v180 = vunpack.c.h.b16 %v78
    %v181 = vunpack.c.l.b16 %v79
    %v182 = vunpack.c.h.b16 %v79
    %v183 = vunpack.c.l.b16 %v80
    %v184 = vunpack.c.h.b16 %v80
    %v185 = vunpack.c.l.b16 %v81
    %v186 = vunpack.c.h.b16 %v81
    %v187 = vunpack.c.l.b16 %v82
    %v188 = vunpack.c.h.b16 %v82
    %v189 = vunpack.c.l.b16 %v83
    %v190 = vunpack.c.h.b16 %v83
    %v191 = vunpack.c.l.b16 %v84
    %v192 = vunpack.c.h.b16 %v84
    %v193 = vunpack.c.l.b16 %v85
    %v194 = vunpack.c.h.b16 %v85
    %v195 = vunpack.c.l.b16 %v86
    %v196 = vunpack.c.h.b16 %v86
    %v197 = vunpack.c.l.b16 %v87
    %v198 = vunpack.c.h.b16 %v87
    %v199 = vunpack.c.l.b16 %v88
    %v200 = vunpack.c.h.b16 %v88
    %v201 = vunpack.c.l.b16 %v89
    %v202 = vunpack.c.h.b16 %v89
    %v203 = vunpack.c.l.b16 %v90
    %v204 = vunpack.c.h.b16 %v90
    %v205 = vunpack.c.l.b16 %v91
    %v206 = vunpack.c.h.b16 %v91
    %v207 = vunpack.c.l.b16 %v92
    %v208 = vunpack.c.h.b16 %v92
    %v209 = vunpack.c.l.b16 %v93
    %v210 = vunpack.c.h.b16 %v93
    %v211 = vunpack.c.l.b16 %v94
    %v212 = vunpack.c.h.b16 %v94
    %v213 = vpack.c.b16 %v153, %v149
    %v214 = vpack.c.b16 %v154, %v150
    %v215 = vpack.c.b16 %v155, %v151
    %v216 = vpack.c.b16 %v156, %v152
    %v217 = vpack.c.b16 %v161, %v157
    %v218 = vpack.c.b16 %v162, %v158
    %v219 = vpack.c.b16 %v163, %v159
    %v220 = vpack.c.b16 %v164, %v160
    %v221 = vpack.c.b16 %v169, %v165
    %v222 = vpack.c.b16 %v170, %v166
    %v223 = vpack.c.b16 %v171, %v167
    %v224 = vpack.c.b16 %v172, %v168
    %v225 = vpack.c.b16 %v177, %v173
    %v226 = vpack.c.b16 %v178, %v174
    %v227 = vpack.c.b16 %v179, %v175
    %v228 = vpack.c.b16 %v180, %v176
    %v229 = vpack.c.b16 %v185, %v181
    %v230 = vpack.c.b16 %v186, %v182
    %v231 = vpack.c.b16 %v187, %v183
    %v232 = vpack.c.b16 %v188, %v184
    %v233 = vpack.c.b16 %v193, %v189
    %v234 = vpack.c.b16 %v194, %v190
    %v235 = vpack.c.b16 %v195, %v191
    %v236 = vpack.c.b16 %v196, %v192
    %v237 = vpack.c.b16 %v201, %v197
    %v238 = vpack.c.b16 %v202, %v198
    %v239 = vpack.c.b16 %v203, %v199
    %v240 = vpack.c.b16 %v204, %v200
    %v241 = vpack.c.b16 %v209, %v205
    %v242 = vpack.c.b16 %v210, %v206
    %v243 = vpack.c.b16 %v211, %v207
    %v244 = vpack.c.b16 %v212, %v208
    %277 = vmatprep.subr.bf16.mxu0 %v214
    %278 = vmatpush1.bf16.msra.mxu0 %v213
    %279 = vmatprep.subr.bf16.mxu0 %v218
    %280 = vmatpush1.bf16.msra.mxu0 %v217
    %281 = vmatprep.subr.bf16.mxu0 %v222
    %282 = vmatpush1.bf16.msra.mxu0 %v221
    %283 = vmatprep.subr.bf16.mxu0 %v226
    %284 = vmatpush1.bf16.msra.mxu0 %v225
    %285 = vmatprep.subr.bf16.mxu0 %v230
    %286 = vmatpush1.bf16.msra.mxu0 %v229
    %287 = vmatprep.subr.bf16.mxu0 %v234
    %288 = vmatpush1.bf16.msra.mxu0 %v233
    %289 = vmatprep.subr.bf16.mxu0 %v238
    %290 = vmatpush1.bf16.msra.mxu0 %v237
    %291 = vmatprep.subr.bf16.mxu0 %v242
    %292 = vmatpush1.bf16.msra.mxu0 %v241
    %293 = vmatprep.subr.bf16.mxu0 0
    %294 = vmatpush1.bf16.msra.mxu0 0
    %295 = vmatprep.subr.bf16.mxu0 0
    %296 = vmatpush1.bf16.msra.mxu0 0
    %297 = vmatprep.subr.bf16.mxu0 0
    %298 = vmatpush1.bf16.msra.mxu0 0
    %299 = vmatprep.subr.bf16.mxu0 0
    %300 = vmatpush1.bf16.msra.mxu0 0
    %301 = vmatprep.subr.bf16.mxu0 0
    %302 = vmatpush1.bf16.msra.mxu0 0
    %303 = vmatprep.subr.bf16.mxu0 0
    %304 = vmatpush1.bf16.msra.mxu0 0
    %305 = vmatprep.subr.bf16.mxu0 0
    %306 = vmatpush1.bf16.msra.mxu0 0
    %307 = vmatprep.subr.bf16.mxu0 0
    %308 = vmatpush1.bf16.msra.mxu0 0
    %309 = vmatprep.mubr.bf16.mxu0 0
    %310 = vmatmul.mubr.bf16.gmra.mrb[0].mxu0 %v62
    %v311 = vpop.f32.mrb[0].mxu0
    %v312 = vadd.f32 %v100, %v311
    %v313 = vpop.f32.mrb[0].mxu0
    %v314 = vadd.f32 %v104, %v313
    %v315 = vpop.f32.mrb[0].mxu0
    %v316 = vpop.f32.mrb[0].mxu0
    %317 = vdwg.mxu0
    %318 = vmatprep.subr.bf16.mxu0 %v216
    %319 = vmatpush1.bf16.msra.mxu0 %v215
    %320 = vmatprep.subr.bf16.mxu0 %v220
    %321 = vmatpush1.bf16.msra.mxu0 %v219
    %322 = vmatprep.subr.bf16.mxu0 %v224
    %323 = vmatpush1.bf16.msra.mxu0 %v223
    %324 = vmatprep.subr.bf16.mxu0 %v228
    %325 = vmatpush1.bf16.msra.mxu0 %v227
    %326 = vmatprep.subr.bf16.mxu0 %v232
    %327 = vmatpush1.bf16.msra.mxu0 %v231
    %328 = vmatprep.subr.bf16.mxu0 %v236
    %329 = vmatpush1.bf16.msra.mxu0 %v235
    %330 = vmatprep.subr.bf16.mxu0 %v240
    %331 = vmatpush1.bf16.msra.mxu0 %v239
    %332 = vmatprep.subr.bf16.mxu0 %v244
    %333 = vmatpush1.bf16.msra.mxu0 %v243
    %334 = vmatprep.subr.bf16.mxu0 0
    %335 = vmatpush1.bf16.msra.mxu0 0
    %336 = vmatprep.subr.bf16.mxu0 0
    %337 = vmatpush1.bf16.msra.mxu0 0
    %338 = vmatprep.subr.bf16.mxu0 0
    %339 = vmatpush1.bf16.msra.mxu0 0
    %340 = vmatprep.subr.bf16.mxu0 0
    %341 = vmatpush1.bf16.msra.mxu0 0
    %342 = vmatprep.subr.bf16.mxu0 0
    %343 = vmatpush1.bf16.msra.mxu0 0
    %344 = vmatprep.subr.bf16.mxu0 0
    %345 = vmatpush1.bf16.msra.mxu0 0
    %346 = vmatprep.subr.bf16.mxu0 0
    %347 = vmatpush1.bf16.msra.mxu0 0
    %348 = vmatprep.subr.bf16.mxu0 0
    %349 = vmatpush1.bf16.msra.mxu0 0
    %350 = vmatprep.mubr.bf16.mxu0 0
    %351 = vmatmul.mubr.bf16.gmra.mrb[0].mxu0 %v62
    %v352 = vpop.f32.mrb[0].mxu0
    %v353 = vadd.f32 %v108, %v352
    %v354 = vpop.f32.mrb[0].mxu0
    %v355 = vadd.f32 %v112, %v354
    %v356 = vpop.f32.mrb[0].mxu0
    %v357 = vpop.f32.mrb[0].mxu0
    %358 = vdwg.mxu0
    %v359 = vmax.f32 %v312, 0.0
    %v360 = vmax.f32 %v314, 0.0
    %v361 = vmax.f32 %v353, 0.0
    %v362 = vmax.f32 %v355, 0.0
    %v363 = vpack.c.bf16 %v359, %v359
    %v364 = vpack.c.bf16 %v360, %v360
    %v365 = vpack.c.bf16 %v361, %v361
    %v366 = vpack.c.bf16 %v362, %v362
    %v367 = vld [vmem:[#allocation7] sm:$0xf]
    %v368 = vld [vmem:[#allocation7 + $0x4] sm:$0xf]
    %v369 = vld [vmem:[#allocation7 + $0x8] sm:$0xf]
    %v370 = vld [vmem:[#allocation7 + $0xc] sm:$0xf]
    %v371 = vld [vmem:[#allocation7 + $0x10] sm:$0xf]
    %v372 = vld [vmem:[#allocation7 + $0x14] sm:$0xf]
    %v373 = vld [vmem:[#allocation7 + $0x18] sm:$0xf]
    %v374 = vld [vmem:[#allocation7 + $0x1c] sm:$0xf]
    %v375 = vld [vmem:[#allocation7 + $0x20] sm:$0xf]
    %v376 = vld [vmem:[#allocation7 + $0x24] sm:$0xf]
    %v377 = vld [vmem:[#allocation7 + $0x28] sm:$0xf]
    %v378 = vld [vmem:[#allocation7 + $0x2c] sm:$0xf]
    %v379 = vld [vmem:[#allocation7 + $0x30] sm:$0xf]
    %v380 = vld [vmem:[#allocation7 + $0x34] sm:$0xf]
    %v381 = vld [vmem:[#allocation7 + $0x38] sm:$0xf]
    %v382 = vld [vmem:[#allocation7 + $0x3c] sm:$0xf]
    %v383 = vld [vmem:[#allocation7 + $0x40] sm:$0xf]
    %v384 = vld [vmem:[#allocation7 + $0x44] sm:$0xf]
    %v385 = vld [vmem:[#allocation7 + $0x48] sm:$0xf]
    %v386 = vld [vmem:[#allocation7 + $0x4c] sm:$0xf]
    %v387 = vld [vmem:[#allocation7 + $0x50] sm:$0xf]
    %v388 = vld [vmem:[#allocation7 + $0x54] sm:$0xf]
    %v389 = vld [vmem:[#allocation7 + $0x58] sm:$0xf]
    %v390 = vld [vmem:[#allocation7 + $0x5c] sm:$0xf]
    %v391 = vld [vmem:[#allocation7 + $0x60] sm:$0xf]
    %v392 = vld [vmem:[#allocation7 + $0x64] sm:$0xf]
    %v393 = vld [vmem:[#allocation7 + $0x68] sm:$0xf]
    %v394 = vld [vmem:[#allocation7 + $0x6c] sm:$0xf]
    %v395 = vld [vmem:[#allocation7 + $0x70] sm:$0xf]
    %v396 = vld [vmem:[#allocation7 + $0x74] sm:$0xf]
    %v397 = vld [vmem:[#allocation7 + $0x78] sm:$0xf]
    %v398 = vld [vmem:[#allocation7 + $0x7c] sm:$0xf]
    %v399 = vld [vmem:[#allocation7 + $0x80] sm:$0xf]
    %v400 = vld [vmem:[#allocation7 + $0x84] sm:$0xf]
    %v401 = vld [vmem:[#allocation7 + $0x88] sm:$0xf]
    %v402 = vld [vmem:[#allocation7 + $0x8c] sm:$0xf]
    %v403 = vld [vmem:[#allocation7 + $0x90] sm:$0xf]
    %v404 = vld [vmem:[#allocation7 + $0x94] sm:$0xf]
    %v405 = vld [vmem:[#allocation7 + $0x98] sm:$0xf]
    %v406 = vld [vmem:[#allocation7 + $0x9c] sm:$0xf]
    %v407 = vld [vmem:[#allocation7 + $0xa0] sm:$0xf]
    %v408 = vld [vmem:[#allocation7 + $0xa4] sm:$0xf]
    %v409 = vld [vmem:[#allocation7 + $0xa8] sm:$0xf]
    %v410 = vld [vmem:[#allocation7 + $0xac] sm:$0xf]
    %v411 = vld [vmem:[#allocation7 + $0xb0] sm:$0xf]
    %v412 = vld [vmem:[#allocation7 + $0xb4] sm:$0xf]
    %v413 = vld [vmem:[#allocation7 + $0xb8] sm:$0xf]
    %v414 = vld [vmem:[#allocation7 + $0xbc] sm:$0xf]
    %v415 = vld [vmem:[#allocation7 + $0xc0] sm:$0xf]
    %v416 = vld [vmem:[#allocation7 + $0xc4] sm:$0xf]
    %v417 = vld [vmem:[#allocation7 + $0xc8] sm:$0xf]
    %v418 = vld [vmem:[#allocation7 + $0xcc] sm:$0xf]
    %v419 = vld [vmem:[#allocation7 + $0xd0] sm:$0xf]
    %v420 = vld [vmem:[#allocation7 + $0xd4] sm:$0xf]
    %v421 = vld [vmem:[#allocation7 + $0xd8] sm:$0xf]
    %v422 = vld [vmem:[#allocation7 + $0xdc] sm:$0xf]
    %v423 = vld [vmem:[#allocation7 + $0xe0] sm:$0xf]
    %v424 = vld [vmem:[#allocation7 + $0xe4] sm:$0xf]
    %v425 = vld [vmem:[#allocation7 + $0xe8] sm:$0xf]
    %v426 = vld [vmem:[#allocation7 + $0xec] sm:$0xf]
    %v427 = vld [vmem:[#allocation7 + $0xf0] sm:$0xf]
    %v428 = vld [vmem:[#allocation7 + $0xf4] sm:$0xf]
    %v429 = vld [vmem:[#allocation7 + $0xf8] sm:$0xf]
    %v430 = vld [vmem:[#allocation7 + $0xfc] sm:$0xf]
    %v431 = vld [vmem:[%s4] sm:$0x1]
    %v433 = vlaneseq
    %v434 = vshrl.u32 %v433, 7
    %v435 = vsub.s32 0, %v434
    %v436 = vrot.slane %v431, %v435
    %v502 = vunpack.c.l.b16 %v367
    %v503 = vunpack.c.l.b16 %v368
    %v504 = vunpack.c.l.b16 %v369
    %v505 = vunpack.c.l.b16 %v370
    %v506 = vunpack.c.l.b16 %v371
    %v507 = vunpack.c.l.b16 %v372
    %v508 = vunpack.c.l.b16 %v373
    %v509 = vunpack.c.l.b16 %v374
    %v510 = vunpack.c.l.b16 %v375
    %v511 = vunpack.c.l.b16 %v376
    %v512 = vunpack.c.l.b16 %v377
    %v513 = vunpack.c.l.b16 %v378
    %v514 = vunpack.c.l.b16 %v379
    %v515 = vunpack.c.l.b16 %v380
    %v516 = vunpack.c.l.b16 %v381
    %v517 = vunpack.c.l.b16 %v382
    %v518 = vunpack.c.l.b16 %v383
    %v519 = vunpack.c.l.b16 %v384
    %v520 = vunpack.c.l.b16 %v385
    %v521 = vunpack.c.l.b16 %v386
    %v522 = vunpack.c.l.b16 %v387
    %v523 = vunpack.c.l.b16 %v388
    %v524 = vunpack.c.l.b16 %v389
    %v525 = vunpack.c.l.b16 %v390
    %v526 = vunpack.c.l.b16 %v391
    %v527 = vunpack.c.l.b16 %v392
    %v528 = vunpack.c.l.b16 %v393
    %v529 = vunpack.c.l.b16 %v394
    %v530 = vunpack.c.l.b16 %v395
    %v531 = vunpack.c.l.b16 %v396
    %v532 = vunpack.c.l.b16 %v397
    %v533 = vunpack.c.l.b16 %v398
    %v534 = vunpack.c.l.b16 %v399
    %v535 = vunpack.c.l.b16 %v400
    %v536 = vunpack.c.l.b16 %v401
    %v537 = vunpack.c.l.b16 %v402
    %v538 = vunpack.c.l.b16 %v403
    %v539 = vunpack.c.l.b16 %v404
    %v540 = vunpack.c.l.b16 %v405
    %v541 = vunpack.c.l.b16 %v406
    %v542 = vunpack.c.l.b16 %v407
    %v543 = vunpack.c.l.b16 %v408
    %v544 = vunpack.c.l.b16 %v409
    %v545 = vunpack.c.l.b16 %v410
    %v546 = vunpack.c.l.b16 %v411
    %v547 = vunpack.c.l.b16 %v412
    %v548 = vunpack.c.l.b16 %v413
    %v549 = vunpack.c.l.b16 %v414
    %v550 = vunpack.c.l.b16 %v415
    %v551 = vunpack.c.l.b16 %v416
    %v552 = vunpack.c.l.b16 %v417
    %v553 = vunpack.c.l.b16 %v418
    %v554 = vunpack.c.l.b16 %v419
    %v555 = vunpack.c.l.b16 %v420
    %v556 = vunpack.c.l.b16 %v421
    %v557 = vunpack.c.l.b16 %v422
    %v558 = vunpack.c.l.b16 %v423
    %v559 = vunpack.c.l.b16 %v424
    %v560 = vunpack.c.l.b16 %v425
    %v561 = vunpack.c.l.b16 %v426
    %v562 = vunpack.c.l.b16 %v427
    %v563 = vunpack.c.l.b16 %v428
    %v564 = vunpack.c.l.b16 %v429
    %v565 = vunpack.c.l.b16 %v430
    %v566 = vpack.c.b16 %v503, %v502
    %v567 = vpack.c.b16 %v505, %v504
    %v568 = vpack.c.b16 %v507, %v506
    %v569 = vpack.c.b16 %v509, %v508
    %v570 = vpack.c.b16 %v511, %v510
    %v571 = vpack.c.b16 %v513, %v512
    %v572 = vpack.c.b16 %v515, %v514
    %v573 = vpack.c.b16 %v517, %v516
    %v574 = vpack.c.b16 %v519, %v518
    %v575 = vpack.c.b16 %v521, %v520
    %v576 = vpack.c.b16 %v523, %v522
    %v577 = vpack.c.b16 %v525, %v524
    %v578 = vpack.c.b16 %v527, %v526
    %v579 = vpack.c.b16 %v529, %v528
    %v580 = vpack.c.b16 %v531, %v530
    %v581 = vpack.c.b16 %v533, %v532
    %v582 = vpack.c.b16 %v535, %v534
    %v583 = vpack.c.b16 %v537, %v536
    %v584 = vpack.c.b16 %v539, %v538
    %v585 = vpack.c.b16 %v541, %v540
    %v586 = vpack.c.b16 %v543, %v542
    %v587 = vpack.c.b16 %v545, %v544
    %v588 = vpack.c.b16 %v547, %v546
    %v589 = vpack.c.b16 %v549, %v548
    %v590 = vpack.c.b16 %v551, %v550
    %v591 = vpack.c.b16 %v553, %v552
    %v592 = vpack.c.b16 %v555, %v554
    %v593 = vpack.c.b16 %v557, %v556
    %v594 = vpack.c.b16 %v559, %v558
    %v595 = vpack.c.b16 %v561, %v560
    %v596 = vpack.c.b16 %v563, %v562
    %v597 = vpack.c.b16 %v565, %v564
    %630 = vmatprep.subr.bf16.mxu0 0
    %631 = vmatpush1.bf16.msra.mxu0 %v566
    %632 = vmatprep.subr.bf16.mxu0 0
    %633 = vmatpush1.bf16.msra.mxu0 %v567
    %634 = vmatprep.subr.bf16.mxu0 0
    %635 = vmatpush1.bf16.msra.mxu0 %v568
    %636 = vmatprep.subr.bf16.mxu0 0
    %637 = vmatpush1.bf16.msra.mxu0 %v569
    %638 = vmatprep.subr.bf16.mxu0 0
    %639 = vmatpush1.bf16.msra.mxu0 %v570
    %640 = vmatprep.subr.bf16.mxu0 0
    %641 = vmatpush1.bf16.msra.mxu0 %v571
    %642 = vmatprep.subr.bf16.mxu0 0
    %643 = vmatpush1.bf16.msra.mxu0 %v572
    %644 = vmatprep.subr.bf16.mxu0 0
    %645 = vmatpush1.bf16.msra.mxu0 %v573
    %646 = vmatprep.subr.bf16.mxu0 0
    %647 = vmatpush1.bf16.msra.mxu0 %v574
    %648 = vmatprep.subr.bf16.mxu0 0
    %649 = vmatpush1.bf16.msra.mxu0 %v575
    %650 = vmatprep.subr.bf16.mxu0 0
    %651 = vmatpush1.bf16.msra.mxu0 %v576
    %652 = vmatprep.subr.bf16.mxu0 0
    %653 = vmatpush1.bf16.msra.mxu0 %v577
    %654 = vmatprep.subr.bf16.mxu0 0
    %655 = vmatpush1.bf16.msra.mxu0 %v578
    %656 = vmatprep.subr.bf16.mxu0 0
    %657 = vmatpush1.bf16.msra.mxu0 %v579
    %658 = vmatprep.subr.bf16.mxu0 0
    %659 = vmatpush1.bf16.msra.mxu0 %v580
    %660 = vmatprep.subr.bf16.mxu0 0
    %661 = vmatpush1.bf16.msra.mxu0 %v581
    %662 = vmatprep.mubr.bf16.mxu0 %v364
    %663 = vmatmul.mubr.bf16.gmra.mrb[0].mxu0 %v363
    %v664 = vpop.f32.mrb[0].mxu0
    %v665 = vadd.f32 %v436, %v664
    %v666 = vpop.f32.mrb[0].mxu0
    %v667 = vpop.f32.mrb[0].mxu0
    %v668 = vpop.f32.mrb[0].mxu0
    %669 = vdwg.mxu0
    %670 = vmatprep.subr.bf16.mxu0 0
    %671 = vmatpush1.bf16.msra.mxu0 %v582
    %672 = vmatprep.subr.bf16.mxu0 0
    %673 = vmatpush1.bf16.msra.mxu0 %v583
    %674 = vmatprep.subr.bf16.mxu0 0
    %675 = vmatpush1.bf16.msra.mxu0 %v584
    %676 = vmatprep.subr.bf16.mxu0 0
    %677 = vmatpush1.bf16.msra.mxu0 %v585
    %678 = vmatprep.subr.bf16.mxu0 0
    %679 = vmatpush1.bf16.msra.mxu0 %v586
    %680 = vmatprep.subr.bf16.mxu0 0
    %681 = vmatpush1.bf16.msra.mxu0 %v587
    %682 = vmatprep.subr.bf16.mxu0 0
    %683 = vmatpush1.bf16.msra.mxu0 %v588
    %684 = vmatprep.subr.bf16.mxu0 0
    %685 = vmatpush1.bf16.msra.mxu0 %v589
    %686 = vmatprep.subr.bf16.mxu0 0
    %687 = vmatpush1.bf16.msra.mxu0 %v590
    %688 = vmatprep.subr.bf16.mxu0 0
    %689 = vmatpush1.bf16.msra.mxu0 %v591
    %690 = vmatprep.subr.bf16.mxu0 0
    %691 = vmatpush1.bf16.msra.mxu0 %v592
    %692 = vmatprep.subr.bf16.mxu0 0
    %693 = vmatpush1.bf16.msra.mxu0 %v593
    %694 = vmatprep.subr.bf16.mxu0 0
    %695 = vmatpush1.bf16.msra.mxu0 %v594
    %696 = vmatprep.subr.bf16.mxu0 0
    %697 = vmatpush1.bf16.msra.mxu0 %v595
    %698 = vmatprep.subr.bf16.mxu0 0
    %699 = vmatpush1.bf16.msra.mxu0 %v596
    %700 = vmatprep.subr.bf16.mxu0 0
    %701 = vmatpush1.bf16.msra.mxu0 %v597
    %702 = vmatprep.mubr.bf16.mxu0 %v366
    %703 = vmatmul.mubr.bf16.gmra.mrb[0].mxu0 %v365
    %v704 = vpop.f32.mrb[0].mxu0
    %v705 = vadd.f32 %v665, %v704
    %v706 = vpop.f32.mrb[0].mxu0
    %v707 = vpop.f32.mrb[0].mxu0
    %v708 = vpop.f32.mrb[0].mxu0
    %709 = vdwg.mxu0
    %710 = vst [vmem:[#allocation8] sm:$0xff] %v705
    // Predicated region
    $region34: #{tpu_custom_call.1} parent=1 // pred_check
      _
    $region35: #{tpu_custom_call.1} parent=1 // pred_check_branch
      %712 = sbr.rel (0) target = $region37
    $region36: #{tpu_custom_call.1} parent=1 // pred_region
      %s714 = ssub.s32 128, 128
      %715 = vsyncadd [#allocation4], %s714
      %s717 = sshll.u32 [#allocation8], 4
      %s718 = int_to_ptr.vmem [resolvable:$true] %s717
      %720 = dma.vmem_to_hbm [thread:$0]  %s718, 128, %s5, [#allocation4]
    $region37: #{tpu_custom_call.1} parent=1 // pred_fallthru
      _
    // Predicated region
    $region38: #{tpu_custom_call.1} parent=1 // pred_check
      _
    $region39: #{tpu_custom_call.1} parent=1 // pred_check_branch
      %722 = sbr.rel (0) target = $region41
    $region40: #{tpu_custom_call.1} parent=1 // pred_region
      %723 = dma.done [#allocation4], 128
    $region41: #{tpu_custom_call.1} parent=1 // pred_fallthru
      _
    %724 = vsyncpa [#allocation3], 1
    %725 = vsyncpa [#allocation6], 1
    %726 = vsyncpa [#allocation4], 1

// kernel: tpu_custom_call.1
$region0: #{tpu_custom_call.1}
  #allocation0 [shape = 'u32[]', space=smem, size = 0x4, offset = 0x4, fixed_abs, tag = 'smem constant byte address 0x4 - core index']
  #allocation1 [shape = 'u32[144,128]{1,0:T(1,128)}', space=vmem, size = 0x12000, scoped, tag = 'internal scratch']
  %s0 = inlined_call_operand.hbm [shape: f32[8,128], index: 0, kind: input, shape index: {}]
  %s1 = inlined_call_operand.hbm [shape: bf16[128,512], index: 1, kind: input, shape index: {}]
  %s2 = inlined_call_operand.vmem [shape: f32[1,512], index: 2, kind: input, shape index: {}]
  %s3 = inlined_call_operand.hbm [shape: bf16[512,128], index: 3, kind: input, shape index: {}]
  %s4 = inlined_call_operand.vmem [shape: f32[1,128], index: 4, kind: input, shape index: {}]
  %s5 = inlined_call_operand.hbm [shape: f32[8,128], index: 5, kind: output, shape index: {}]
  %s6 = sld [smem:[#allocation0]]
  $region42: #{tpu_custom_call.1} parent=0
    _
  %s8 = ssub.s32 1, %s6
  %s9 = scalar_select 0, %s8, %s6
  $region1: #{tpu_custom_call.1} parent=0
    #allocation2 [shape = 'u8[4096]{0}', space=vmem, size = 0x1000, scoped, tag = 'input window, operand 0, single buffered']
    #allocation3 [shape = 's32[1]{0}', space=sflag, size = 0x4, scoped, tag = 'scoped memory for tpu_custom_call.1']
    #allocation4 [shape = 's32[1]{0}', space=sflag, size = 0x4, scoped, tag = 'scoped memory for tpu_custom_call.1']
    #allocation5 [shape = 'u8[131072]{0}', space=vmem, size = 0x20000, scoped, tag = 'input window, operand 1, single buffered']
    #allocation6 [shape = 's32[1]{0}', space=sflag, size = 0x4, scoped, tag = 'scoped memory for tpu_custom_call.1']
    #allocation7 [shape = 'u8[131072]{0}', space=vmem, size = 0x20000, scoped, tag = 'input window, operand 3, single buffered']
    #allocation8 [shape = 'u8[4096]{0}', space=vmem, size = 0x1000, scoped, tag = 'output window, operand 0, single buffered']
    %10 = vsyncpa [#allocation3], 0
    %11 = vsyncpa [#allocation6], 0
    %12 = vsyncpa [#allocation4], 0
    // Predicated region
    $region2: #{tpu_custom_call.1} parent=1 // pred_check
      _
    $region3: #{tpu_custom_call.1} parent=1 // pred_check_branch
      %14 = sbr.rel (0) target = $region5
    $region4: #{tpu_custom_call.1} parent=1 // pred_region
      %s16 = ssub.s32 128, 128
      %17 = vsyncadd [#allocation3], %s16
      %s19 = sshll.u32 [#allocation2], 4
      %s20 = int_to_ptr.vmem [resolvable:$true] %s19
      %22 = dma.hbm_to_vmem [thread:$0]  %s0, 128, %s20, [#allocation3]
    $region5: #{tpu_custom_call.1} parent=1 // pred_fallthru
      _
    // Predicated region
    $region6: #{tpu_custom_call.1} parent=1 // pred_check
      _
    $region7: #{tpu_custom_call.1} parent=1 // pred_check_branch
      %24 = sbr.rel (0) target = $region9
    $region8: #{tpu_custom_call.1} parent=1 // pred_region
      %s26 = ssub.s32 4096, 4096
      %27 = vsyncadd [#allocation6], %s26
      %s28 = sshll.u32 [#allocation5], 4
      %s29 = int_to_ptr.vmem [resolvable:$true] %s28
      %34 = dma.hbm_to_vmem [thread:$0]  %s1, 4096, %s29, [#allocation6], 256, 256, 16
    $region9: #{tpu_custom_call.1} parent=1 // pred_fallthru
      _
    // Predicated region
    $region10: #{tpu_custom_call.1} parent=1 // pred_check
      _
    $region11: #{tpu_custom_call.1} parent=1 // pred_check_branch
      %36 = sbr.rel (0) target = $region13
    $region12: #{tpu_custom_call.1} parent=1 // pred_region
      _
    $region13: #{tpu_custom_call.1} parent=1 // pred_fallthru
      _
    // Predicated region
    $region14: #{tpu_custom_call.1} parent=1 // pred_check
      _
    $region15: #{tpu_custom_call.1} parent=1 // pred_check_branch
      %38 = sbr.rel (0) target = $region17
    $region16: #{tpu_custom_call.1} parent=1 // pred_region
      %s40 = ssub.s32 4096, 4096
      %41 = vsyncadd [#allocation6], %s40
      %s42 = sshll.u32 [#allocation7], 4
      %s43 = int_to_ptr.vmem [resolvable:$true] %s42
      %48 = dma.hbm_to_vmem [thread:$0]  %s3, 4096, %s43, [#allocation6], 64, 64, 4
    $region17: #{tpu_custom_call.1} parent=1 // pred_fallthru
      _
    // Predicated region
    $region18: #{tpu_custom_call.1} parent=1 // pred_check
      _
    $region19: #{tpu_custom_call.1} parent=1 // pred_check_branch
      %50 = sbr.rel (0) target = $region21
    $region20: #{tpu_custom_call.1} parent=1 // pred_region
      _
    $region21: #{tpu_custom_call.1} parent=1 // pred_fallthru
      _
    // Predicated region
    $region22: #{tpu_custom_call.1} parent=1 // pred_check
      _
    $region23: #{tpu_custom_call.1} parent=1 // pred_check_branch
      %52 = sbr.rel (0) target = $region25
    $region24: #{tpu_custom_call.1} parent=1 // pred_region
      %53 = dma.done [#allocation3], 128
    $region25: #{tpu_custom_call.1} parent=1 // pred_fallthru
      _
    // Predicated region
    $region26: #{tpu_custom_call.1} parent=1 // pred_check
      _
    $region27: #{tpu_custom_call.1} parent=1 // pred_check_branch
      %55 = sbr.rel (0) target = $region29
    $region28: #{tpu_custom_call.1} parent=1 // pred_region
      %56 = dma.done [#allocation6], 4096
    $region29: #{tpu_custom_call.1} parent=1 // pred_fallthru
      _
    // Predicated region
    $region30: #{tpu_custom_call.1} parent=1 // pred_check
      _
    $region31: #{tpu_custom_call.1} parent=1 // pred_check_branch
      %58 = sbr.rel (0) target = $region33
    $region32: #{tpu_custom_call.1} parent=1 // pred_region
      %59 = dma.done [#allocation6], 4096
    $region33: #{tpu_custom_call.1} parent=1 // pred_fallthru
      _
    %v61 = vld [vmem:[#allocation2] sm:$0xff]
    %v62 = vpack.c.bf16 %v61, %v61
    %v63 = vld [vmem:[#allocation5] sm:$0xff]
    %v64 = vld [vmem:[#allocation5 + $0x8] sm:$0xff]
    %v65 = vld [vmem:[#allocation5 + $0x10] sm:$0xff]
    %v66 = vld [vmem:[#allocation5 + $0x18] sm:$0xff]
    %v67 = vld [vmem:[#allocation5 + $0x20] sm:$0xff]
    %v68 = vld [vmem:[#allocation5 + $0x28] sm:$0xff]
    %v69 = vld [vmem:[#allocation5 + $0x30] sm:$0xff]
    %v70 = vld [vmem:[#allocation5 + $0x38] sm:$0xff]
    %v71 = vld [vmem:[#allocation5 + $0x40] sm:$0xff]
    %v72 = vld [vmem:[#allocation5 + $0x48] sm:$0xff]
    %v73 = vld [vmem:[#allocation5 + $0x50] sm:$0xff]
    %v74 = vld [vmem:[#allocation5 + $0x58] sm:$0xff]
    %v75 = vld [vmem:[#allocation5 + $0x60] sm:$0xff]
    %v76 = vld [vmem:[#allocation5 + $0x68] sm:$0xff]
    %v77 = vld [vmem:[#allocation5 + $0x70] sm:$0xff]
    %v78 = vld [vmem:[#allocation5 + $0x78] sm:$0xff]
    %v79 = vld [vmem:[#allocation5 + $0x80] sm:$0xff]
    %v80 = vld [vmem:[#allocation5 + $0x88] sm:$0xff]
    %v81 = vld [vmem:[#allocation5 + $0x90] sm:$0xff]
    %v82 = vld [vmem:[#allocation5 + $0x98] sm:$0xff]
    %v83 = vld [vmem:[#allocation5 + $0xa0] sm:$0xff]
    %v84 = vld [vmem:[#allocation5 + $0xa8] sm:$0xff]
    %v85 = vld [vmem:[#allocation5 + $0xb0] sm:$0xff]
    %v86 = vld [vmem:[#allocation5 + $0xb8] sm:$0xff]
    %v87 = vld [vmem:[#allocation5 + $0xc0] sm:$0xff]
    %v88 = vld [vmem:[#allocation5 + $0xc8] sm:$0xff]
    %v89 = vld [vmem:[#allocation5 + $0xd0] sm:$0xff]
    %v90 = vld [vmem:[#allocation5 + $0xd8] sm:$0xff]
    %v91 = vld [vmem:[#allocation5 + $0xe0] sm:$0xff]
    %v92 = vld [vmem:[#allocation5 + $0xe8] sm:$0xff]
    %v93 = vld [vmem:[#allocation5 + $0xf0] sm:$0xff]
    %v94 = vld [vmem:[#allocation5 + $0xf8] sm:$0xff]
    %v95 = vld [vmem:[%s2] sm:$0xf]
    %v97 = vlaneseq
    %v98 = vshrl.u32 %v97, 7
    %v99 = vsub.s32 0, %v98
    %v100 = vrot.slane %v95, %v99
    %v101 = vlaneseq
    %v102 = vshrl.u32 %v101, 7
    %v103 = vsub.s32 1, %v102
    %v104 = vrot.slane %v95, %v103
    %v105 = vlaneseq
    %v106 = vshrl.u32 %v105, 7
    %v107 = vsub.s32 2, %v106
    %v108 = vrot.slane %v95, %v107
    %v109 = vlaneseq
    %v110 = vshrl.u32 %v109, 7
    %v111 = vsub.s32 3, %v110
    %v112 = vrot.slane %v95, %v111
    %v149 = vunpack.c.l.b16 %v63
    %v150 = vunpack.c.h.b16 %v63
    %v151 = vunpack.c.l.b16 %v64
    %v152 = vunpack.c.h.b16 %v64
    %v153 = vunpack.c.l.b16 %v65
    %v154 = vunpack.c.h.b16 %v65
    %v155 = vunpack.c.l.b16 %v66
    %v156 = vunpack.c.h.b16 %v66
    %v157 = vunpack.c.l.b16 %v67
    %v158 = vunpack.c.h.b16 %v67
    %v159 = vunpack.c.l.b16 %v68
    %v160 = vunpack.c.h.b16 %v68
    %v161 = vunpack.c.l.b16 %v69
    %v162 = vunpack.c.h.b16 %v69
    %v163 = vunpack.c.l.b16 %v70
    %v164 = vunpack.c.h.b16 %v70
    %v165 = vunpack.c.l.b16 %v71
    %v166 = vunpack.c.h.b16 %v71
    %v167 = vunpack.c.l.b16 %v72
    %v168 = vunpack.c.h.b16 %v72
    %v169 = vunpack.c.l.b16 %v73
    %v170 = vunpack.c.h.b16 %v73
    %v171 = vunpack.c.l.b16 %v74
    %v172 = vunpack.c.h.b16 %v74
    %v173 = vunpack.c.l.b16 %v75
    %v174 = vunpack.c.h.b16 %v75
    %v175 = vunpack.c.l.b16 %v76
    %v176 = vunpack.c.h.b16 %v76
    %v177 = vunpack.c.l.b16 %v77
    %v178 = vunpack.c.h.b16 %v77
    %v179 = vunpack.c.l.b16 %v78
    %v180 = vunpack.c.h.b16 %v78
    %v181 = vunpack.c.l.b16 %v79
    %v182 = vunpack.c.h.b16 %v79
    %v183 = vunpack.c.l.b16 %v80
    %v184 = vunpack.c.h.b16 %v80
    %v185 = vunpack.c.l.b16 %v81
    %v186 = vunpack.c.h.b16 %v81
    %v187 = vunpack.c.l.b16 %v82
    %v188 = vunpack.c.h.b16 %v82
    %v189 = vunpack.c.l.b16 %v83
    %v190 = vunpack.c.h.b16 %v83
    %v191 = vunpack.c.l.b16 %v84
    %v192 = vunpack.c.h.b16 %v84
    %v193 = vunpack.c.l.b16 %v85
    %v194 = vunpack.c.h.b16 %v85
    %v195 = vunpack.c.l.b16 %v86
    %v196 = vunpack.c.h.b16 %v86
    %v197 = vunpack.c.l.b16 %v87
    %v198 = vunpack.c.h.b16 %v87
    %v199 = vunpack.c.l.b16 %v88
    %v200 = vunpack.c.h.b16 %v88
    %v201 = vunpack.c.l.b16 %v89
    %v202 = vunpack.c.h.b16 %v89
    %v203 = vunpack.c.l.b16 %v90
    %v204 = vunpack.c.h.b16 %v90
    %v205 = vunpack.c.l.b16 %v91
    %v206 = vunpack.c.h.b16 %v91
    %v207 = vunpack.c.l.b16 %v92
    %v208 = vunpack.c.h.b16 %v92
    %v209 = vunpack.c.l.b16 %v93
    %v210 = vunpack.c.h.b16 %v93
    %v211 = vunpack.c.l.b16 %v94
    %v212 = vunpack.c.h.b16 %v94
    %v213 = vpack.c.b16 %v153, %v149
    %v214 = vpack.c.b16 %v154, %v150
    %v215 = vpack.c.b16 %v155, %v151
    %v216 = vpack.c.b16 %v156, %v152
    %v217 = vpack.c.b16 %v161, %v157
    %v218 = vpack.c.b16 %v162, %v158
    %v219 = vpack.c.b16 %v163, %v159
    %v220 = vpack.c.b16 %v164, %v160
    %v221 = vpack.c.b16 %v169, %v165
    %v222 = vpack.c.b16 %v170, %v166
    %v223 = vpack.c.b16 %v171, %v167
    %v224 = vpack.c.b16 %v172, %v168
    %v225 = vpack.c.b16 %v177, %v173
    %v226 = vpack.c.b16 %v178, %v174
    %v227 = vpack.c.b16 %v179, %v175
    %v228 = vpack.c.b16 %v180, %v176
    %v229 = vpack.c.b16 %v185, %v181
    %v230 = vpack.c.b16 %v186, %v182
    %v231 = vpack.c.b16 %v187, %v183
    %v232 = vpack.c.b16 %v188, %v184
    %v233 = vpack.c.b16 %v193, %v189
    %v234 = vpack.c.b16 %v194, %v190
    %v235 = vpack.c.b16 %v195, %v191
    %v236 = vpack.c.b16 %v196, %v192
    %v237 = vpack.c.b16 %v201, %v197
    %v238 = vpack.c.b16 %v202, %v198
    %v239 = vpack.c.b16 %v203, %v199
    %v240 = vpack.c.b16 %v204, %v200
    %v241 = vpack.c.b16 %v209, %v205
    %v242 = vpack.c.b16 %v210, %v206
    %v243 = vpack.c.b16 %v211, %v207
    %v244 = vpack.c.b16 %v212, %v208
    %277 = vmatprep.subr.bf16.mxu0 %v214
    %278 = vmatpush1.bf16.msra.mxu0 %v213
    %279 = vmatprep.subr.bf16.mxu0 %v218
    %280 = vmatpush1.bf16.msra.mxu0 %v217
    %281 = vmatprep.subr.bf16.mxu0 %v222
    %282 = vmatpush1.bf16.msra.mxu0 %v221
    %283 = vmatprep.subr.bf16.mxu0 %v226
    %284 = vmatpush1.bf16.msra.mxu0 %v225
    %285 = vmatprep.subr.bf16.mxu0 %v230
    %286 = vmatpush1.bf16.msra.mxu0 %v229
    %287 = vmatprep.subr.bf16.mxu0 %v234
    %288 = vmatpush1.bf16.msra.mxu0 %v233
    %289 = vmatprep.subr.bf16.mxu0 %v238
    %290 = vmatpush1.bf16.msra.mxu0 %v237
    %291 = vmatprep.subr.bf16.mxu0 %v242
    %292 = vmatpush1.bf16.msra.mxu0 %v241
    %293 = vmatprep.subr.bf16.mxu0 0
    %294 = vmatpush1.bf16.msra.mxu0 0
    %295 = vmatprep.subr.bf16.mxu0 0
    %296 = vmatpush1.bf16.msra.mxu0 0
    %297 = vmatprep.subr.bf16.mxu0 0
    %298 = vmatpush1.bf16.msra.mxu0 0
    %299 = vmatprep.subr.bf16.mxu0 0
    %300 = vmatpush1.bf16.msra.mxu0 0
    %301 = vmatprep.subr.bf16.mxu0 0
    %302 = vmatpush1.bf16.msra.mxu0 0
    %303 = vmatprep.subr.bf16.mxu0 0
    %304 = vmatpush1.bf16.msra.mxu0 0
    %305 = vmatprep.subr.bf16.mxu0 0
    %306 = vmatpush1.bf16.msra.mxu0 0
    %307 = vmatprep.subr.bf16.mxu0 0
    %308 = vmatpush1.bf16.msra.mxu0 0
    %309 = vmatprep.mubr.bf16.mxu0 0
    %310 = vmatmul.mubr.bf16.gmra.mrb[0].mxu0 %v62
    %v311 = vpop.f32.mrb[0].mxu0
    %v312 = vadd.f32 %v100, %v311
    %v313 = vpop.f32.mrb[0].mxu0
    %v314 = vadd.f32 %v104, %v313
    %v315 = vpop.f32.mrb[0].mxu0
    %v316 = vpop.f32.mrb[0].mxu0
    %317 = vdwg.mxu0
    %318 = vmatprep.subr.bf16.mxu0 %v216
    %319 = vmatpush1.bf16.msra.mxu0 %v215
    %320 = vmatprep.subr.bf16.mxu0 %v220
    %321 = vmatpush1.bf16.msra.mxu0 %v219
    %322 = vmatprep.subr.bf16.mxu0 %v224
    %323 = vmatpush1.bf16.msra.mxu0 %v223
    %324 = vmatprep.subr.bf16.mxu0 %v228
    %325 = vmatpush1.bf16.msra.mxu0 %v227
    %326 = vmatprep.subr.bf16.mxu0 %v232
    %327 = vmatpush1.bf16.msra.mxu0 %v231
    %328 = vmatprep.subr.bf16.mxu0 %v236
    %329 = vmatpush1.bf16.msra.mxu0 %v235
    %330 = vmatprep.subr.bf16.mxu0 %v240
    %331 = vmatpush1.bf16.msra.mxu0 %v239
    %332 = vmatprep.subr.bf16.mxu0 %v244
    %333 = vmatpush1.bf16.msra.mxu0 %v243
    %334 = vmatprep.subr.bf16.mxu0 0
    %335 = vmatpush1.bf16.msra.mxu0 0
    %336 = vmatprep.subr.bf16.mxu0 0
    %337 = vmatpush1.bf16.msra.mxu0 0
    %338 = vmatprep.subr.bf16.mxu0 0
    %339 = vmatpush1.bf16.msra.mxu0 0
    %340 = vmatprep.subr.bf16.mxu0 0
    %341 = vmatpush1.bf16.msra.mxu0 0
    %342 = vmatprep.subr.bf16.mxu0 0
    %343 = vmatpush1.bf16.msra.mxu0 0
    %344 = vmatprep.subr.bf16.mxu0 0
    %345 = vmatpush1.bf16.msra.mxu0 0
    %346 = vmatprep.subr.bf16.mxu0 0
    %347 = vmatpush1.bf16.msra.mxu0 0
    %348 = vmatprep.subr.bf16.mxu0 0
    %349 = vmatpush1.bf16.msra.mxu0 0
    %350 = vmatprep.mubr.bf16.mxu0 0
    %351 = vmatmul.mubr.bf16.gmra.mrb[0].mxu0 %v62
    %v352 = vpop.f32.mrb[0].mxu0
    %v353 = vadd.f32 %v108, %v352
    %v354 = vpop.f32.mrb[0].mxu0
    %v355 = vadd.f32 %v112, %v354
    %v356 = vpop.f32.mrb[0].mxu0
    %v357 = vpop.f32.mrb[0].mxu0
    %358 = vdwg.mxu0
    %v359 = vmax.f32 %v312, 0.0
    %v360 = vmax.f32 %v314, 0.0
    %v361 = vmax.f32 %v353, 0.0
    %v362 = vmax.f32 %v355, 0.0
    %v363 = vpack.c.bf16 %v359, %v359
    %v364 = vpack.c.bf16 %v360, %v360
    %v365 = vpack.c.bf16 %v361, %v361
    %v366 = vpack.c.bf16 %v362, %v362
    %v367 = vld [vmem:[#allocation7] sm:$0xf]
    %v368 = vld [vmem:[#allocation7 + $0x4] sm:$0xf]
    %v369 = vld [vmem:[#allocation7 + $0x8] sm:$0xf]
    %v370 = vld [vmem:[#allocation7 + $0xc] sm:$0xf]
    %v371 = vld [vmem:[#allocation7 + $0x10] sm:$0xf]
    %v372 = vld [vmem:[#allocation7 + $0x14] sm:$0xf]
    %v373 = vld [vmem:[#allocation7 + $0x18] sm:$0xf]
    %v374 = vld [vmem:[#allocation7 + $0x1c] sm:$0xf]
    %v375 = vld [vmem:[#allocation7 + $0x20] sm:$0xf]
    %v376 = vld [vmem:[#allocation7 + $0x24] sm:$0xf]
    %v377 = vld [vmem:[#allocation7 + $0x28] sm:$0xf]
    %v378 = vld [vmem:[#allocation7 + $0x2c] sm:$0xf]
    %v379 = vld [vmem:[#allocation7 + $0x30] sm:$0xf]
    %v380 = vld [vmem:[#allocation7 + $0x34] sm:$0xf]
    %v381 = vld [vmem:[#allocation7 + $0x38] sm:$0xf]
    %v382 = vld [vmem:[#allocation7 + $0x3c] sm:$0xf]
    %v383 = vld [vmem:[#allocation7 + $0x40] sm:$0xf]
    %v384 = vld [vmem:[#allocation7 + $0x44] sm:$0xf]
    %v385 = vld [vmem:[#allocation7 + $0x48] sm:$0xf]
    %v386 = vld [vmem:[#allocation7 + $0x4c] sm:$0xf]
    %v387 = vld [vmem:[#allocation7 + $0x50] sm:$0xf]
    %v388 = vld [vmem:[#allocation7 + $0x54] sm:$0xf]
    %v389 = vld [vmem:[#allocation7 + $0x58] sm:$0xf]
    %v390 = vld [vmem:[#allocation7 + $0x5c] sm:$0xf]
    %v391 = vld [vmem:[#allocation7 + $0x60] sm:$0xf]
    %v392 = vld [vmem:[#allocation7 + $0x64] sm:$0xf]
    %v393 = vld [vmem:[#allocation7 + $0x68] sm:$0xf]
    %v394 = vld [vmem:[#allocation7 + $0x6c] sm:$0xf]
    %v395 = vld [vmem:[#allocation7 + $0x70] sm:$0xf]
    %v396 = vld [vmem:[#allocation7 + $0x74] sm:$0xf]
    %v397 = vld [vmem:[#allocation7 + $0x78] sm:$0xf]
    %v398 = vld [vmem:[#allocation7 + $0x7c] sm:$0xf]
    %v399 = vld [vmem:[#allocation7 + $0x80] sm:$0xf]
    %v400 = vld [vmem:[#allocation7 + $0x84] sm:$0xf]
    %v401 = vld [vmem:[#allocation7 + $0x88] sm:$0xf]
    %v402 = vld [vmem:[#allocation7 + $0x8c] sm:$0xf]
    %v403 = vld [vmem:[#allocation7 + $0x90] sm:$0xf]
    %v404 = vld [vmem:[#allocation7 + $0x94] sm:$0xf]
    %v405 = vld [vmem:[#allocation7 + $0x98] sm:$0xf]
    %v406 = vld [vmem:[#allocation7 + $0x9c] sm:$0xf]
    %v407 = vld [vmem:[#allocation7 + $0xa0] sm:$0xf]
    %v408 = vld [vmem:[#allocation7 + $0xa4] sm:$0xf]
    %v409 = vld [vmem:[#allocation7 + $0xa8] sm:$0xf]
    %v410 = vld [vmem:[#allocation7 + $0xac] sm:$0xf]
    %v411 = vld [vmem:[#allocation7 + $0xb0] sm:$0xf]
    %v412 = vld [vmem:[#allocation7 + $0xb4] sm:$0xf]
    %v413 = vld [vmem:[#allocation7 + $0xb8] sm:$0xf]
    %v414 = vld [vmem:[#allocation7 + $0xbc] sm:$0xf]
    %v415 = vld [vmem:[#allocation7 + $0xc0] sm:$0xf]
    %v416 = vld [vmem:[#allocation7 + $0xc4] sm:$0xf]
    %v417 = vld [vmem:[#allocation7 + $0xc8] sm:$0xf]
    %v418 = vld [vmem:[#allocation7 + $0xcc] sm:$0xf]
    %v419 = vld [vmem:[#allocation7 + $0xd0] sm:$0xf]
    %v420 = vld [vmem:[#allocation7 + $0xd4] sm:$0xf]
    %v421 = vld [vmem:[#allocation7 + $0xd8] sm:$0xf]
    %v422 = vld [vmem:[#allocation7 + $0xdc] sm:$0xf]
    %v423 = vld [vmem:[#allocation7 + $0xe0] sm:$0xf]
    %v424 = vld [vmem:[#allocation7 + $0xe4] sm:$0xf]
    %v425 = vld [vmem:[#allocation7 + $0xe8] sm:$0xf]
    %v426 = vld [vmem:[#allocation7 + $0xec] sm:$0xf]
    %v427 = vld [vmem:[#allocation7 + $0xf0] sm:$0xf]
    %v428 = vld [vmem:[#allocation7 + $0xf4] sm:$0xf]
    %v429 = vld [vmem:[#allocation7 + $0xf8] sm:$0xf]
    %v430 = vld [vmem:[#allocation7 + $0xfc] sm:$0xf]
    %v431 = vld [vmem:[%s4] sm:$0x1]
    %v433 = vlaneseq
    %v434 = vshrl.u32 %v433, 7
    %v435 = vsub.s32 0, %v434
    %v436 = vrot.slane %v431, %v435
    %v502 = vunpack.c.l.b16 %v367
    %v503 = vunpack.c.l.b16 %v368
    %v504 = vunpack.c.l.b16 %v369
    %v505 = vunpack.c.l.b16 %v370
    %v506 = vunpack.c.l.b16 %v371
    %v507 = vunpack.c.l.b16 %v372
    %v508 = vunpack.c.l.b16 %v373
    %v509 = vunpack.c.l.b16 %v374
    %v510 = vunpack.c.l.b16 %v375
    %v511 = vunpack.c.l.b16 %v376
    %v512 = vunpack.c.l.b16 %v377
    %v513 = vunpack.c.l.b16 %v378
    %v514 = vunpack.c.l.b16 %v379
    %v515 = vunpack.c.l.b16 %v380
    %v516 = vunpack.c.l.b16 %v381
    %v517 = vunpack.c.l.b16 %v382
    %v518 = vunpack.c.l.b16 %v383
    %v519 = vunpack.c.l.b16 %v384
    %v520 = vunpack.c.l.b16 %v385
    %v521 = vunpack.c.l.b16 %v386
    %v522 = vunpack.c.l.b16 %v387
    %v523 = vunpack.c.l.b16 %v388
    %v524 = vunpack.c.l.b16 %v389
    %v525 = vunpack.c.l.b16 %v390
    %v526 = vunpack.c.l.b16 %v391
    %v527 = vunpack.c.l.b16 %v392
    %v528 = vunpack.c.l.b16 %v393
    %v529 = vunpack.c.l.b16 %v394
    %v530 = vunpack.c.l.b16 %v395
    %v531 = vunpack.c.l.b16 %v396
    %v532 = vunpack.c.l.b16 %v397
    %v533 = vunpack.c.l.b16 %v398
    %v534 = vunpack.c.l.b16 %v399
    %v535 = vunpack.c.l.b16 %v400
    %v536 = vunpack.c.l.b16 %v401
    %v537 = vunpack.c.l.b16 %v402
    %v538 = vunpack.c.l.b16 %v403
    %v539 = vunpack.c.l.b16 %v404
    %v540 = vunpack.c.l.b16 %v405
    %v541 = vunpack.c.l.b16 %v406
    %v542 = vunpack.c.l.b16 %v407
    %v543 = vunpack.c.l.b16 %v408
    %v544 = vunpack.c.l.b16 %v409
    %v545 = vunpack.c.l.b16 %v410
    %v546 = vunpack.c.l.b16 %v411
    %v547 = vunpack.c.l.b16 %v412
    %v548 = vunpack.c.l.b16 %v413
    %v549 = vunpack.c.l.b16 %v414
    %v550 = vunpack.c.l.b16 %v415
    %v551 = vunpack.c.l.b16 %v416
    %v552 = vunpack.c.l.b16 %v417
    %v553 = vunpack.c.l.b16 %v418
    %v554 = vunpack.c.l.b16 %v419
    %v555 = vunpack.c.l.b16 %v420
    %v556 = vunpack.c.l.b16 %v421
    %v557 = vunpack.c.l.b16 %v422
    %v558 = vunpack.c.l.b16 %v423
    %v559 = vunpack.c.l.b16 %v424
    %v560 = vunpack.c.l.b16 %v425
    %v561 = vunpack.c.l.b16 %v426
    %v562 = vunpack.c.l.b16 %v427
    %v563 = vunpack.c.l.b16 %v428
    %v564 = vunpack.c.l.b16 %v429
    %v565 = vunpack.c.l.b16 %v430
    %v566 = vpack.c.b16 %v503, %v502
    %v567 = vpack.c.b16 %v505, %v504
    %v568 = vpack.c.b16 %v507, %v506
    %v569 = vpack.c.b16 %v509, %v508
    %v570 = vpack.c.b16 %v511, %v510
    %v571 = vpack.c.b16 %v513, %v512
    %v572 = vpack.c.b16 %v515, %v514
    %v573 = vpack.c.b16 %v517, %v516
    %v574 = vpack.c.b16 %v519, %v518
    %v575 = vpack.c.b16 %v521, %v520
    %v576 = vpack.c.b16 %v523, %v522
    %v577 = vpack.c.b16 %v525, %v524
    %v578 = vpack.c.b16 %v527, %v526
    %v579 = vpack.c.b16 %v529, %v528
    %v580 = vpack.c.b16 %v531, %v530
    %v581 = vpack.c.b16 %v533, %v532
    %v582 = vpack.c.b16 %v535, %v534
    %v583 = vpack.c.b16 %v537, %v536
    %v584 = vpack.c.b16 %v539, %v538
    %v585 = vpack.c.b16 %v541, %v540
    %v586 = vpack.c.b16 %v543, %v542
    %v587 = vpack.c.b16 %v545, %v544
    %v588 = vpack.c.b16 %v547, %v546
    %v589 = vpack.c.b16 %v549, %v548
    %v590 = vpack.c.b16 %v551, %v550
    %v591 = vpack.c.b16 %v553, %v552
    %v592 = vpack.c.b16 %v555, %v554
    %v593 = vpack.c.b16 %v557, %v556
    %v594 = vpack.c.b16 %v559, %v558
    %v595 = vpack.c.b16 %v561, %v560
    %v596 = vpack.c.b16 %v563, %v562
    %v597 = vpack.c.b16 %v565, %v564
    %630 = vmatprep.subr.bf16.mxu0 0
    %631 = vmatpush1.bf16.msra.mxu0 %v566
    %632 = vmatprep.subr.bf16.mxu0 0
    %633 = vmatpush1.bf16.msra.mxu0 %v567
    %634 = vmatprep.subr.bf16.mxu0 0
    %635 = vmatpush1.bf16.msra.mxu0 %v568
    %636 = vmatprep.subr.bf16.mxu0 0
    %637 = vmatpush1.bf16.msra.mxu0 %v569
    %638 = vmatprep.subr.bf16.mxu0 0
    %639 = vmatpush1.bf16.msra.mxu0 %v570
    %640 = vmatprep.subr.bf16.mxu0 0
    %641 = vmatpush1.bf16.msra.mxu0 %v571
    %642 = vmatprep.subr.bf16.mxu0 0
    %643 = vmatpush1.bf16.msra.mxu0 %v572
    %644 = vmatprep.subr.bf16.mxu0 0
    %645 = vmatpush1.bf16.msra.mxu0 %v573
    %646 = vmatprep.subr.bf16.mxu0 0
    %647 = vmatpush1.bf16.msra.mxu0 %v574
    %648 = vmatprep.subr.bf16.mxu0 0
    %649 = vmatpush1.bf16.msra.mxu0 %v575
    %650 = vmatprep.subr.bf16.mxu0 0
    %651 = vmatpush1.bf16.msra.mxu0 %v576
    %652 = vmatprep.subr.bf16.mxu0 0
    %653 = vmatpush1.bf16.msra.mxu0 %v577
    %654 = vmatprep.subr.bf16.mxu0 0
    %655 = vmatpush1.bf16.msra.mxu0 %v578
    %656 = vmatprep.subr.bf16.mxu0 0
    %657 = vmatpush1.bf16.msra.mxu0 %v579
    %658 = vmatprep.subr.bf16.mxu0 0
    %659 = vmatpush1.bf16.msra.mxu0 %v580
    %660 = vmatprep.subr.bf16.mxu0 0
    %661 = vmatpush1.bf16.msra.mxu0 %v581
    %662 = vmatprep.mubr.bf16.mxu0 %v364
    %663 = vmatmul.mubr.bf16.gmra.mrb[0].mxu0 %v363
    %v664 = vpop.f32.mrb[0].mxu0
    %v665 = vadd.f32 %v436, %v664
    %v666 = vpop.f32.mrb[0].mxu0
    %v667 = vpop.f32.mrb[0].mxu0
    %v668 = vpop.f32.mrb[0].mxu0
    %669 = vdwg.mxu0
    %670 = vmatprep.subr.bf16.mxu0 0
    %671 = vmatpush1.bf16.msra.mxu0 %v582
    %672 = vmatprep.subr.bf16.mxu0 0
    %673 = vmatpush1.bf16.msra.mxu0 %v583
    %674 = vmatprep.subr.bf16.mxu0 0
    %675 = vmatpush1.bf16.msra.mxu0 %v584
    %676 = vmatprep.subr.bf16.mxu0 0
    %677 = vmatpush1.bf16.msra.mxu0 %v585
    %678 = vmatprep.subr.bf16.mxu0 0
    %679 = vmatpush1.bf16.msra.mxu0 %v586
    %680 = vmatprep.subr.bf16.mxu0 0
    %681 = vmatpush1.bf16.msra.mxu0 %v587
    %682 = vmatprep.subr.bf16.mxu0 0
    %683 = vmatpush1.bf16.msra.mxu0 %v588
    %684 = vmatprep.subr.bf16.mxu0 0
    %685 = vmatpush1.bf16.msra.mxu0 %v589
    %686 = vmatprep.subr.bf16.mxu0 0
    %687 = vmatpush1.bf16.msra.mxu0 %v590
    %688 = vmatprep.subr.bf16.mxu0 0
    %689 = vmatpush1.bf16.msra.mxu0 %v591
    %690 = vmatprep.subr.bf16.mxu0 0
    %691 = vmatpush1.bf16.msra.mxu0 %v592
    %692 = vmatprep.subr.bf16.mxu0 0
    %693 = vmatpush1.bf16.msra.mxu0 %v593
    %694 = vmatprep.subr.bf16.mxu0 0
    %695 = vmatpush1.bf16.msra.mxu0 %v594
    %696 = vmatprep.subr.bf16.mxu0 0
    %697 = vmatpush1.bf16.msra.mxu0 %v595
    %698 = vmatprep.subr.bf16.mxu0 0
    %699 = vmatpush1.bf16.msra.mxu0 %v596
    %700 = vmatprep.subr.bf16.mxu0 0
    %701 = vmatpush1.bf16.msra.mxu0 %v597
    %702 = vmatprep.mubr.bf16.mxu0 %v366
    %703 = vmatmul.mubr.bf16.gmra.mrb[0].mxu0 %v365
    %v704 = vpop.f32.mrb[0].mxu0
    %v705 = vadd.f32 %v665, %v704
    %v706 = vpop.f32.mrb[0].mxu0
    %v707 = vpop.f32.mrb[0].mxu0
    %v708 = vpop.f32.mrb[0].mxu0
    %709 = vdwg.mxu0
    %710 = vst [vmem:[#allocation8] sm:$0xff] %v705
    // Predicated region
    $region34: #{tpu_custom_call.1} parent=1 // pred_check
      _
    $region35: #{tpu_custom_call.1} parent=1 // pred_check_branch
      %712 = sbr.rel (0) target = $region37
    $region36: #{tpu_custom_call.1} parent=1 // pred_region
      %s714 = ssub.s32 128, 128
      %715 = vsyncadd [#allocation4], %s714
      %s717 = sshll.u32 [#allocation8], 4
      %s718 = int_to_ptr.vmem [resolvable:$true] %s717
      %720 = dma.vmem_to_hbm [thread:$0]  %s718, 128, %s5, [#allocation4]
    $region37: #{tpu_custom_call.1} parent=1 // pred_fallthru
      _
    // Predicated region
    $region38: #{tpu_custom_call.1} parent=1 // pred_check
      _
    $region39: #{tpu_custom_call.1} parent=1 // pred_check_branch
      %722 = sbr.rel (0) target = $region41
    $region40: #{tpu_custom_call.1} parent=1 // pred_region
      %723 = dma.done [#allocation4], 128
    $region41: #{tpu_custom_call.1} parent=1 // pred_fallthru
      _
    %724 = vsyncpa [#allocation3], 1
    %725 = vsyncpa [#allocation6], 1
    %726 = vsyncpa [#allocation4], 1

</llo_original>
